<compile_context>
chip_gen: v6e
topology: v6e:2x2x1
jax: 0.10.0
libtpu: 0.0.40
codegen_flags: <defaults>
</compile_context>

<pallas_src>
import functools

import jax
import jax.numpy as jnp
from jax.experimental import pallas as pl
from jax.experimental.pallas import tpu as pltpu

_SQRT_HALF = 0.7071067811865476
_VMEM_LIMIT = 64 * 1024 * 1024  # explicit budget; fits v5e/v6e/v7x


def _round_up(v, m):
    return ((v + m - 1) // m) * m


def _gelu_exact(x):
    # matches torch.nn.GELU() default (erf based)
    return 0.5 * x * (1.0 + jax.lax.erf(x * _SQRT_HALF))


# ---------------------------------------------------------------------------
# Kernel 1: fused  y = act((x @ w) * scale + shift)   (linear / conv / conv+BN)
# ---------------------------------------------------------------------------
def _matmul_kernel(x_ref, w_ref, s_ref, h_ref, o_ref, *, act):
    y = jnp.dot(x_ref[...], w_ref[...], preferred_element_type=jnp.float32)
    y = y * s_ref[...] + h_ref[...]
    if act == "relu":
        y = jnp.maximum(y, 0.0)
    elif act == "gelu":
        y = _gelu_exact(y)
    o_ref[...] = y.astype(o_ref.dtype)


def matmul_scale_shift_act(x, w, scale, shift, act="none", tm=256):
    """x: (M, K), w: (K, N), scale/shift: (N,) -> act((x @ w) * scale + shift)."""
    M, K = x.shape
    K2, N = w.shape
    assert K == K2
    tm_eff = min(tm, _round_up(M, 8))          # big tile, clamped for tiny M
    Mp = _round_up(M, tm_eff)
    Kp = _round_up(K, 128)                     # lane-dense contraction
    Np = _round_up(N, 128)                     # lane-dense (unmasked) stores

    xp = jnp.pad(x, ((0, Mp - M), (0, Kp - K)))
    wp = jnp.pad(w, ((0, Kp - K), (0, Np - N)))
    sp = jnp.pad(scale, (0, Np - N)).reshape(1, Np)
    hp = jnp.pad(shift, (0, Np - N)).reshape(1, Np)

    out = pl.pallas_call(
        functools.partial(_matmul_kernel, act=act),
        out_shape=jax.ShapeDtypeStruct((Mp, Np), x.dtype),
        grid_spec=pltpu.PrefetchScalarGridSpec(
            num_scalar_prefetch=0,
            grid=(Mp // tm_eff,),
            in_specs=[
                pl.BlockSpec((tm_eff, Kp), lambda i: (i, 0)),
                pl.BlockSpec((Kp, Np), lambda i: (0, 0)),   # weights resident
                pl.BlockSpec((1, Np), lambda i: (0, 0)),
                pl.BlockSpec((1, Np), lambda i: (0, 0)),
            ],
            out_specs=pl.BlockSpec((tm_eff, Np), lambda i: (i, 0)),
        ),
        compiler_params=pltpu.CompilerParams(
            dimension_semantics=("parallel",),
            vmem_limit_bytes=_VMEM_LIMIT,
        ),
    )(xp, wp, sp, hp)
    return out[:M, :N]


# ---------------------------------------------------------------------------
# Kernel 2: fused MLP  fc2(gelu(fc1(x)))  (keeps the (M,H) intermediate in VMEM)
# ---------------------------------------------------------------------------
def _mlp_kernel(x_ref, w1_ref, b1_ref, w2_ref, b2_ref, o_ref):
    h = jnp.dot(x_ref[...], w1_ref[...], preferred_element_type=jnp.float32) + b1_ref[...]
    h = _gelu_exact(h)
    y = jnp.dot(h, w2_ref[...], preferred_element_type=jnp.float32) + b2_ref[...]
    o_ref[...] = y.astype(o_ref.dtype)


def mlp_pallas(x, w1, b1, w2, b2, tm=256):
    """x: (B, N, C); w1: (C, H); w2: (H, O) (already (in, out) layout)."""
    B, N, C = x.shape
    H = w1.shape[1]
    O = w2.shape[1]
    M = B * N
    tm_eff = min(tm, _round_up(M, 8))
    Mp = _round_up(M, tm_eff)
    Cp = _round_up(C, 128)
    Hp = _round_up(H, 128)
    Op = _round_up(O, 128)

    x2 = jnp.pad(x.reshape(M, C), ((0, Mp - M), (0, Cp - C)))
    w1p = jnp.pad(w1, ((0, Cp - C), (0, Hp - H)))
    b1p = jnp.pad(b1, (0, Hp - H)).reshape(1, Hp)
    w2p = jnp.pad(w2, ((0, Hp - H), (0, Op - O)))
    b2p = jnp.pad(b2, (0, Op - O)).reshape(1, Op)

    out = pl.pallas_call(
        _mlp_kernel,
        out_shape=jax.ShapeDtypeStruct((Mp, Op), x.dtype),
        grid_spec=pltpu.PrefetchScalarGridSpec(
            num_scalar_prefetch=0,
            grid=(Mp // tm_eff,),
            in_specs=[
                pl.BlockSpec((tm_eff, Cp), lambda i: (i, 0)),
                pl.BlockSpec((Cp, Hp), lambda i: (0, 0)),
                pl.BlockSpec((1, Hp), lambda i: (0, 0)),
                pl.BlockSpec((Hp, Op), lambda i: (0, 0)),
                pl.BlockSpec((1, Op), lambda i: (0, 0)),
            ],
            out_specs=pl.BlockSpec((tm_eff, Op), lambda i: (i, 0)),
        ),
        compiler_params=pltpu.CompilerParams(
            dimension_semantics=("parallel",),
            vmem_limit_bytes=_VMEM_LIMIT,
        ),
    )(x2, w1p, b1p, w2p, b2p)
    return out[:M, :O].reshape(B, N, O)


# ---------------------------------------------------------------------------
# Kernel 3: LayerNorm (+ optional fused exact GELU)
# ---------------------------------------------------------------------------
def _layernorm_kernel(x_ref, g_ref, b_ref, o_ref, *, eps, act):
    x = x_ref[...]
    mean = jnp.mean(x, axis=-1, keepdims=True)
    xc = x - mean
    var = jnp.mean(xc * xc, axis=-1, keepdims=True)
    y = xc * jax.lax.rsqrt(var + eps) * g_ref[...] + b_ref[...]
    if act == "gelu":
        y = _gelu_exact(y)
    o_ref[...] = y.astype(o_ref.dtype)


def layernorm_pallas(x2d, gamma, beta, eps=1e-6, act="none", tm=256):
    M, C = x2d.shape
    tm_eff = min(tm, _round_up(M, 8))
    Mp = _round_up(M, tm_eff)
    xp = jnp.pad(x2d, ((0, Mp - M), (0, 0)))
    g = gamma.reshape(1, C)
    b = beta.reshape(1, C)
    out = pl.pallas_call(
        functools.partial(_layernorm_kernel, eps=eps, act=act),
        out_shape=jax.ShapeDtypeStruct((Mp, C), x2d.dtype),
        grid_spec=pltpu.PrefetchScalarGridSpec(
            num_scalar_prefetch=0,
            grid=(Mp // tm_eff,),
            in_specs=[
                pl.BlockSpec((tm_eff, C), lambda i: (i, 0)),
                pl.BlockSpec((1, C), lambda i: (0, 0)),
                pl.BlockSpec((1, C), lambda i: (0, 0)),
            ],
            out_specs=pl.BlockSpec((tm_eff, C), lambda i: (i, 0)),
        ),
        compiler_params=pltpu.CompilerParams(
            dimension_semantics=("parallel",),
            vmem_limit_bytes=_VMEM_LIMIT,
        ),
    )(xp, g, b)
    return out[:M]


# ---------------------------------------------------------------------------
# Kernel 4: attention core  softmax(q k^T * scale) -> (attn @ v, attn)
# ---------------------------------------------------------------------------
def _attention_kernel(q_ref, k_ref, v_ref, o_ref, a_ref, *, scale, n_keys):
    q = q_ref[0]                  # (Np, Dp)
    k = k_ref[0]
    v = v_ref[0]
    s = jnp.dot(q, k.T, preferred_element_type=jnp.float32) * scale
    key_ids = jax.lax.broadcasted_iota(jnp.int32, s.shape, 1)
    s = jnp.where(key_ids < n_keys, s, -1e30)       # mask padded keys
    m = jnp.max(s, axis=-1, keepdims=True)
    p = jnp.exp(s - m)
    attn = p / jnp.sum(p, axis=-1, keepdims=True)
    o = jnp.dot(attn, v, preferred_element_type=jnp.float32)
    a_ref[0] = attn.astype(a_ref.dtype)
    o_ref[0] = o.astype(o_ref.dtype)


def attention_core_pallas(q, k, v, scale):
    """q, k, v: (B*heads, N, Dh) -> (out (B*heads,N,Dh), attn (B*heads,N,N))."""
    BH, N, Dh = q.shape
    Np = _round_up(N, 8)
    Dp = _round_up(Dh, 128)
    pad = lambda t: jnp.pad(t, ((0, 0), (0, Np - N), (0, Dp - Dh)))
    qp, kp, vp = pad(q), pad(k), pad(v)

    out, attn = pl.pallas_call(
        functools.partial(_attention_kernel, scale=scale, n_keys=N),
        out_shape=(jax.ShapeDtypeStruct((BH, Np, Dp), q.dtype),
                   jax.ShapeDtypeStruct((BH, Np, Np), jnp.float32)),
        grid_spec=pltpu.PrefetchScalarGridSpec(
            num_scalar_prefetch=0,
            grid=(BH,),
            in_specs=[
                pl.BlockSpec((1, Np, Dp), lambda i: (i, 0, 0)),
                pl.BlockSpec((1, Np, Dp), lambda i: (i, 0, 0)),
                pl.BlockSpec((1, Np, Dp), lambda i: (i, 0, 0)),
            ],
            out_specs=[
                pl.BlockSpec((1, Np, Dp), lambda i: (i, 0, 0)),
                pl.BlockSpec((1, Np, Np), lambda i: (i, 0, 0)),
            ],
        ),
        compiler_params=pltpu.CompilerParams(
            dimension_semantics=("parallel",),
            vmem_limit_bytes=_VMEM_LIMIT,
        ),
    )(qp, kp, vp)
    return out[:, :N, :Dh], attn[:, :N, :N]


# ---------------------------------------------------------------------------
# Convolution helpers (im2col + Pallas matmul; BN folded into scale/shift)
# ---------------------------------------------------------------------------
def _bn_fold(bn, conv_bias=None, eps=1e-6):
    s = bn["g"] / jnp.sqrt(bn["v"] + eps)
    if conv_bias is None:
        shift = bn["b"] - bn["m"] * s
    else:
        shift = bn["b"] + (conv_bias - bn["m"]) * s
    return s, shift


def conv1x1_pallas(x_nchw, w_oihw, scale, shift, act="none", stride=1):
    if stride != 1:
        x_nchw = x_nchw[:, :, ::stride, ::stride]
    B, C, H, W = x_nchw.shape
    O = w_oihw.shape[0]
    x2 = x_nchw.transpose(0, 2, 3, 1).reshape(B * H * W, C)
    wmat = w_oihw.reshape(O, C).T                      # (Cin, Cout)
    y2 = matmul_scale_shift_act(x2, wmat, scale, shift, act=act)
    return y2.reshape(B, H, W, O).transpose(0, 3, 1, 2)


def conv3x3_pallas(x_nchw, w_oihw, scale, shift, act="none", stride=1):
    B, C, H, W = x_nchw.shape
    O = w_oihw.shape[0]
    xh = x_nchw.transpose(0, 2, 3, 1)
    xp = jnp.pad(xh, ((0, 0), (1, 1), (1, 1), (0, 0)))
    rows = [xp[:, ky:ky + H, kx:kx + W, :] for ky in range(3) for kx in range(3)]
    patches = jnp.stack(rows, axis=3)                  # (B, H, W, 9, C)
    if stride != 1:
        patches = patches[:, ::stride, ::stride]
    Ho, Wo = patches.shape[1], patches.shape[2]
    x2 = patches.reshape(B * Ho * Wo, 9 * C)
    wmat = w_oihw.transpose(2, 3, 1, 0).reshape(9 * C, O)   # (ky,kx,ci) x (o)
    y2 = matmul_scale_shift_act(x2, wmat, scale, shift, act=act)
    return y2.reshape(B, Ho, Wo, O).transpose(0, 3, 1, 2)


# ---------------------------------------------------------------------------
# Module forwards (Pallas path)
# ---------------------------------------------------------------------------
def conv_block_forward(p, x, x_t=None, return_x2=True):
    residual = x
    s1, h1 = _bn_fold(p["bn1"])
    h = conv1x1_pallas(x, p["conv1_w"], s1, h1, act="relu")
    h = h if x_t is None else h + x_t
    s2, h2 = _bn_fold(p["bn2"])
    x2 = conv3x3_pallas(h, p["conv2_w"], s2, h2, act="relu", stride=p["stride"])
    s3, h3 = _bn_fold(p["bn3"])
    h = conv1x1_pallas(x2, p["conv3_w"], s3, h3, act="none")
    if p["res_conv"]:
        sr, hr = _bn_fold(p["res_bn"])
        residual = conv1x1_pallas(residual, p["res_w"], sr, hr, act="none",
                                  stride=p["stride"])
    out = jnp.maximum(h + residual, 0.0)
    return (out, x2) if return_x2 else out


def fcu_down_forward(p, x, x_t, dw_stride):
    C_out = p["proj_w"].shape[0]
    ones = jnp.ones((C_out,), x.dtype)
    h = conv1x1_pallas(x, p["proj_w"], ones, p["proj_b"], act="none")
    B, C, H, W = h.shape
    s = dw_stride
    pooled = h.reshape(B, C, H // s, s, W // s, s).mean(axis=(3, 5))
    tokens = pooled.reshape(B, C, -1).transpose(0, 2, 1)       # (B, Ntok, C)
    Bn, Ntok, Cc = tokens.shape
    t2 = layernorm_pallas(tokens.reshape(Bn * Ntok, Cc), p["ln_g"], p["ln_b"],
                          act="gelu")
    tokens = t2.reshape(Bn, Ntok, Cc)
    return jnp.concatenate([x_t[:, :1, :], tokens], axis=1)


def fcu_up_forward(p, x_t, H, W, up_stride):
    B, N, C = x_t.shape
    x_r = x_t[:, 1:].transpose(0, 2, 1).reshape(B, C, H, W)
    s, h = _bn_fold(p["bn"], conv_bias=p["proj_b"])
    y = conv1x1_pallas(x_r, p["proj_w"], s, h, act="relu")
    return jnp.repeat(jnp.repeat(y, up_stride, axis=2), up_stride, axis=3)


def trans_block_forward(p, x, num_heads):
    B, N, C = x.shape
    Dh = C // num_heads
    scale = Dh ** (-0.5)

    xn = layernorm_pallas(x.reshape(B * N, C), p["ln1_g"], p["ln1_b"]).reshape(B, N, C)
    ones3 = jnp.ones((3 * C,), x.dtype)
    zeros3 = jnp.zeros((3 * C,), x.dtype)
    qkv = matmul_scale_shift_act(xn.reshape(B * N, C), p["qkv_w"], ones3, zeros3)
    qkv = qkv.reshape(B, N, 3, num_heads, Dh).transpose(2, 0, 3, 1, 4)
    q = qkv[0].reshape(B * num_heads, N, Dh)
    k = qkv[1].reshape(B * num_heads, N, Dh)
    v = qkv[2].reshape(B * num_heads, N, Dh)

    o, attn = attention_core_pallas(q, k, v, scale)
    o = o.reshape(B, num_heads, N, Dh).transpose(0, 2, 1, 3).reshape(B * N, C)

    ones_c = jnp.ones((C,), x.dtype)
    y = matmul_scale_shift_act(o, p["proj_w"], ones_c, p["proj_b"])
    x = x + y.reshape(B, N, C)

    xn2 = layernorm_pallas(x.reshape(B * N, C), p["ln2_g"], p["ln2_b"]).reshape(B, N, C)
    m = mlp_pallas(xn2, p["fc1_w"], p["fc1_b"], p["fc2_w"], p["fc2_b"])
    x = x + m
    return x, attn.reshape(B, num_heads, N, N)


def conv_trans_block_forward(params, x, x_t, dw_stride, num_heads):
    x_out, x2 = conv_block_forward(params["cnn"], x, return_x2=True)
    _, _, H, W = x2.shape
    x_st = fcu_down_forward(params["squeeze"], x2, x_t, dw_stride)
    x_t_new, attn = trans_block_forward(params["trans"], x_st + x_t, num_heads)
    x_t_r = fcu_up_forward(params["expand"], x_t_new, H // dw_stride, W // dw_stride,
                           dw_stride)
    x_final = conv_block_forward(params["fusion"], x_out, x_t=x_t_r, return_x2=False)
    return x_final, x_t_new, attn


# ---------------------------------------------------------------------------
# Pure-JAX reference (mirrors the PyTorch forward, eval-mode BN)
# ---------------------------------------------------------------------------
def ref_conv2d(x, w, stride=1, padding=0, bias=None):
    y = jax.lax.conv_general_dilated(
        x, w, window_strides=(stride, stride),
        padding=[(padding, padding), (padding, padding)],
        dimension_numbers=("NCHW", "OIHW", "NCHW"))
    if bias is not None:
        y = y + bias[None, :, None, None]
    return y


def ref_bn(x, bn, eps=1e-6):
    s = (bn["g"] / jnp.sqrt(bn["v"] + eps))[None, :, None, None]
    return (x - bn["m"][None, :, None, None]) * s + bn["b"][None, :, None, None]


def ref_ln(x, g, b, eps=1e-6):
    mu = jnp.mean(x, axis=-1, keepdims=True)
    var = jnp.mean((x - mu) ** 2, axis=-1, keepdims=True)
    return (x - mu) / jnp.sqrt(var + eps) * g + b


def ref_conv_block(p, x, x_t=None, return_x2=True):
    residual = x
    h = jnp.maximum(ref_bn(ref_conv2d(x, p["conv1_w"]), p["bn1"]), 0.0)
    h = h if x_t is None else h + x_t
    h = ref_conv2d(h, p["conv2_w"], stride=p["stride"], padding=1)
    x2 = jnp.maximum(ref_bn(h, p["bn2"]), 0.0)
    h = ref_bn(ref_conv2d(x2, p["conv3_w"]), p["bn3"])
    if p["res_conv"]:
        residual = ref_bn(ref_conv2d(residual, p["res_w"], stride=p["stride"]),
                          p["res_bn"])
    out = jnp.maximum(h + residual, 0.0)
    return (out, x2) if return_x2 else out


def ref_fcu_down(p, x, x_t, dw_stride):
    h = ref_conv2d(x, p["proj_w"], bias=p["proj_b"])
    B, C, H, W = h.shape
    s = dw_stride
    h = h.reshape(B, C, H // s, s, W // s, s).mean(axis=(3, 5))
    h = h.reshape(B, C, -1).transpose(0, 2, 1)
    h = _gelu_exact(ref_ln(h, p["ln_g"], p["ln_b"]))
    return jnp.concatenate([x_t[:, :1, :], h], axis=1)


def ref_fcu_up(p, x_t, H, W, up_stride):
    B, N, C = x_t.shape
    x_r = x_t[:, 1:].transpose(0, 2, 1).reshape(B, C, H, W)
    h = jnp.maximum(ref_bn(ref_conv2d(x_r, p["proj_w"], bias=p["proj_b"]), p["bn"]), 0.0)
    return jnp.repeat(jnp.repeat(h, up_stride, axis=2), up_stride, axis=3)


def ref_attention(p, x, num_heads):
    B, N, C = x.shape
    Dh = C // num_heads
    qkv = x.reshape(B * N, C) @ p["qkv_w"]
    qkv = qkv.reshape(B, N, 3, num_heads, Dh).transpose(2, 0, 3, 1, 4)
    q, k, v = qkv[0], qkv[1], qkv[2]
    attn = jnp.einsum("bhnd,bhmd->bhnm", q, k) * (Dh ** (-0.5))
    attn = jax.nn.softmax(attn, axis=-1)
    o = jnp.einsum("bhnm,bhmd->bhnd", attn, v)
    o = o.transpose(0, 2, 1, 3).reshape(B * N, C)
    o = o @ p["proj_w"] + p["proj_b"]
    return o.reshape(B, N, C), attn


def ref_block(p, x, num_heads):
    y, attn = ref_attention(p, ref_ln(x, p["ln1_g"], p["ln1_b"]), num_heads)
    x = x + y
    h = ref_ln(x, p["ln2_g"], p["ln2_b"]).reshape(-1, x.shape[-1])
    m = _gelu_exact(h @ p["fc1_w"] + p["fc1_b"]) @ p["fc2_w"] + p["fc2_b"]
    x = x + m.reshape(x.shape)
    return x, attn


def ref_conv_trans_block(params, x, x_t, dw_stride, num_heads):
    x_out, x2 = ref_conv_block(params["cnn"], x)
    _, _, H, W = x2.shape
    x_st = ref_fcu_down(params["squeeze"], x2, x_t, dw_stride)
    x_t_new, attn = ref_block(params["trans"], x_st + x_t, num_heads)
    x_t_r = ref_fcu_up(params["expand"], x_t_new, H // dw_stride, W // dw_stride,
                       dw_stride)
    x_final = ref_conv_block(params["fusion"], x_out, x_t=x_t_r, return_x2=False)
    return x_final, x_t_new, attn


# ---------------------------------------------------------------------------
# Deterministic synthetic parameters (weights stored as (in, out); PyTorch
# Linear stores (out, in) — the transpose would happen once at load time)
# ---------------------------------------------------------------------------
def make_params(key, *, inplanes, outplanes, embed_dim, num_heads, mlp_ratio,
                res_conv, stride):
    kit = iter(jax.random.split(key, 128))

    def nrm(shape, scale=0.05):
        return jax.random.normal(next(kit), shape, jnp.float32) * scale

    def bn(c):
        return {
            "g": 1.0 + nrm((c,), 0.1),
            "b": nrm((c,), 0.1),
            "m": nrm((c,), 0.1),
            "v": 1.0 + jax.random.uniform(next(kit), (c,), jnp.float32),
        }

    def conv_block(inpl, outpl, st, rc):
        med = outpl // 4
        p = {
            "stride": st, "res_conv": rc,
            "conv1_w": nrm((med, inpl, 1, 1)), "bn1": bn(med),
            "conv2_w": nrm((med, med, 3, 3)), "bn2": bn(med),
            "conv3_w": nrm((outpl, med, 1, 1)), "bn3": bn(outpl),
        }
        if rc:
            p["res_w"] = nrm((outpl, inpl, 1, 1))
            p["res_bn"] = bn(outpl)
        return p

    med = outplanes // 4
    hidden = int(embed_dim * mlp_ratio)
    return {
        "cnn": conv_block(inplanes, outplanes, stride, res_conv),
        "fusion": conv_block(outplanes, outplanes, 1, False),
        "squeeze": {
            "proj_w": nrm((embed_dim, med, 1, 1)), "proj_b": nrm((embed_dim,)),
            "ln_g": 1.0 + nrm((embed_dim,), 0.1), "ln_b": nrm((embed_dim,), 0.1),
        },
        "expand": {
            "proj_w": nrm((med, embed_dim, 1, 1)), "proj_b": nrm((med,)),
            "bn": bn(med),
        },
        "trans": {
            "ln1_g": 1.0 + nrm((embed_dim,), 0.1), "ln1_b": nrm((embed_dim,), 0.1),
            "qkv_w": nrm((embed_dim, 3 * embed_dim)),
            "proj_w": nrm((embed_dim, embed_dim)), "proj_b": nrm((embed_dim,)),
            "ln2_g": 1.0 + nrm((embed_dim,), 0.1), "ln2_b": nrm((embed_dim,), 0.1),
            "fc1_w": nrm((embed_dim, hidden)), "fc1_b": nrm((hidden,)),
            "fc2_w": nrm((hidden, embed_dim)), "fc2_b": nrm((embed_dim,)),
        },
    }


if __name__ == "__main__":
    key = jax.random.PRNGKey(0)
    k_params, k_x, k_t = jax.random.split(key, 3)

    # Small config consistent with ConvTransBlock
    B = 2
    inplanes, outplanes = 16, 64
    embed_dim, num_heads = 48, 6
    mlp_ratio = 4.0
    dw_stride = 4
    Hin = Win = 16
    res_conv, stride = True, 1

    params = make_params(k_params, inplanes=inplanes, outplanes=outplanes,
                         embed_dim=embed_dim, num_heads=num_heads,
                         mlp_ratio=mlp_ratio, res_conv=res_conv, stride=stride)

    x = jax.random.normal(k_x, (B, inplanes, Hin, Win), jnp.float32)
    n_tok = (Hin // dw_stride) * (Win // dw_stride) + 1      # +1 class token
    x_t = 0.5 * jax.random.normal(k_t, (B, n_tok, embed_dim), jnp.float32)

    x_out, x_t_out, attn = conv_trans_block_forward(params, x, x_t, dw_stride,
                                                    num_heads)
    x_out = jax.block_until_ready(x_out)
    x_t_out = jax.block_until_ready(x_t_out)
    attn = jax.block_until_ready(attn)

    rx_out, rx_t_out, rattn = ref_conv_trans_block(params, x, x_t, dw_stride,
                                                   num_heads)

    assert x_out.shape == (B, outplanes, Hin, Win)
    assert x_t_out.shape == (B, n_tok, embed_dim)
    assert attn.shape == (B, num_heads, n_tok, n_tok)
    for got, ref, name in [(x_out, rx_out, "x"), (x_t_out, rx_t_out, "x_t"),
                           (attn, rattn, "attn")]:
        assert jnp.allclose(got, ref, atol=2e-3, rtol=2e-3), (
            f"mismatch for {name}: max_err={jnp.max(jnp.abs(got - ref))}")

    print("KERNEL_OK")
</pallas_src>

<mosaic_0001>
module attributes {stable_mosaic.version = 11 : i64} {
  func.func @_matmul_kernel(%arg0: i32, %arg1: memref<256x128xf32, #tpu.memory_space<vmem>>, %arg2: memref<128x128xf32, #tpu.memory_space<vmem>>, %arg3: memref<1x128xf32, #tpu.memory_space<vmem>>, %arg4: memref<1x128xf32, #tpu.memory_space<vmem>>, %arg5: memref<256x128xf32, #tpu.memory_space<vmem>>) attributes {dimension_semantics = [#tpu.dimension_semantics<parallel>], iteration_bounds = array<i64: 2>, scalar_prefetch = 0 : i64, scratch_operands = 0 : i64, tpu.core_type = #tpu.core_type<tc>, window_params = [{transform_indices = @transform_0, window_bounds = array<i64: 256, 128>}, {pipeline_mode = #tpu.pipeline_mode<synchronous>, transform_indices = @transform_1, window_bounds = array<i64: 128, 128>}, {pipeline_mode = #tpu.pipeline_mode<synchronous>, transform_indices = @transform_2, window_bounds = array<i64: 1, 128>}, {pipeline_mode = #tpu.pipeline_mode<synchronous>, transform_indices = @transform_3, window_bounds = array<i64: 1, 128>}, {transform_indices = @transform_4, window_bounds = array<i64: 256, 128>}]} {
    %c0 = arith.constant 0 : index
    %c0_0 = arith.constant 0 : index
    %0 = vector.load %arg1[%c0, %c0_0] : memref<256x128xf32, #tpu.memory_space<vmem>>, vector<256x128xf32>
    %c0_1 = arith.constant 0 : index
    %c0_2 = arith.constant 0 : index
    %1 = vector.load %arg2[%c0_1, %c0_2] : memref<128x128xf32, #tpu.memory_space<vmem>>, vector<128x128xf32>
    %cst = arith.constant dense<0.000000e+00> : vector<256x128xf32>
    %2 = tpu.matmul %0, %1, %cst {dimension_numbers = #tpu.dot_dimension_numbers<[1], [0], [0], [1], [0, 0, 1, 1], [], []>} : vector<256x128xf32>, vector<128x128xf32>, vector<256x128xf32> -> vector<256x128xf32>
    %c0_3 = arith.constant 0 : index
    %c0_4 = arith.constant 0 : index
    %3 = vector.load %arg3[%c0_3, %c0_4] : memref<1x128xf32, #tpu.memory_space<vmem>>, vector<1x128xf32>
    %4 = vector.broadcast %3 : vector<1x128xf32> to vector<256x128xf32>
    %5 = arith.mulf %2, %4 : vector<256x128xf32>
    %c0_5 = arith.constant 0 : index
    %c0_6 = arith.constant 0 : index
    %6 = vector.load %arg4[%c0_5, %c0_6] : memref<1x128xf32, #tpu.memory_space<vmem>>, vector<1x128xf32>
    %7 = vector.broadcast %6 : vector<1x128xf32> to vector<256x128xf32>
    %8 = arith.addf %5, %7 : vector<256x128xf32>
    %cst_7 = arith.constant 0.000000e+00 : f32
    %9 = vector.broadcast %cst_7 : f32 to vector<256x128xf32>
    %10 = arith.maximumf %8, %9 : vector<256x128xf32>
    %c0_8 = arith.constant 0 : index
    %c0_9 = arith.constant 0 : index
    %11 = vector.load %arg5[%c0_8, %c0_9] : memref<256x128xf32, #tpu.memory_space<vmem>>, vector<256x128xf32>
    tpu.vector_store %arg5[%c0_8, %c0_9], %10 {strides = array<i32>} : memref<256x128xf32, #tpu.memory_space<vmem>>, vector<256x128xf32>,
    return
  }
  func.func @transform_0(%arg0: i32) -> (i32, i32) {
    %c0_i32 = arith.constant 0 : i32
    %c0_i32_0 = arith.constant 0 : i32
    return %arg0, %c0_i32 : i32, i32
  }
  func.func @transform_1(%arg0: i32) -> (i32, i32) {
    %c0_i32 = arith.constant 0 : i32
    %c0_i32_0 = arith.constant 0 : i32
    %c0_i32_1 = arith.constant 0 : i32
    return %c0_i32, %c0_i32_0 : i32, i32
  }
  func.func @transform_2(%arg0: i32) -> (i32, i32) {
    %c0_i32 = arith.constant 0 : i32
    %c0_i32_0 = arith.constant 0 : i32
    %c0_i32_1 = arith.constant 0 : i32
    return %c0_i32, %c0_i32_0 : i32, i32
  }
  func.func @transform_3(%arg0: i32) -> (i32, i32) {
    %c0_i32 = arith.constant 0 : i32
    %c0_i32_0 = arith.constant 0 : i32
    %c0_i32_1 = arith.constant 0 : i32
    return %c0_i32, %c0_i32_0 : i32, i32
  }
  func.func @transform_4(%arg0: i32) -> (i32, i32) {
    %c0_i32 = arith.constant 0 : i32
    %c0_i32_0 = arith.constant 0 : i32
    return %arg0, %c0_i32 : i32, i32
  }
}

</mosaic_0001>

<llo_original>
// kernel: tpu_custom_call.1
$region0: #{tpu_custom_call.1}
  #allocation0 [shape = 'u32[]', space=smem, size = 0x4, offset = 0x4, fixed_abs, tag = 'smem constant byte address 0x4 - core index']
  #allocation1 [shape = 'u32[144,128]{1,0:T(1,128)}', space=vmem, size = 0x12000, scoped, tag = 'internal scratch']
  %s0 = inlined_call_operand.hbm [shape: f32[512,128], index: 0, kind: input, shape index: {}]
  %s1 = inlined_call_operand.hbm [shape: f32[128,128], index: 1, kind: input, shape index: {}]
  %s2 = inlined_call_operand.vmem [shape: f32[1,128], index: 2, kind: input, shape index: {}]
  %s3 = inlined_call_operand.vmem [shape: f32[1,128], index: 3, kind: input, shape index: {}]
  %s4 = inlined_call_operand.hbm [shape: f32[512,128], index: 4, kind: output, shape index: {}]
  %s5 = sld [smem:[#allocation0]]
  $region57: #{tpu_custom_call.1} parent=0
    _
  %s7 = ssub.s32 1, %s5
  %s8 = scalar_select 0, %s7, %s5
  $region1: #{tpu_custom_call.1} parent=0
    #allocation2 [shape = 'u8[262144]{0}', space=vmem, size = 0x40000, scoped, tag = 'input window, operand 0']
    #allocation3 [shape = 's32[2]{0}', space=sflag, size = 0x8, scoped, tag = 'scoped memory for tpu_custom_call.1']
    #allocation4 [shape = 's32[2]{0}', space=sflag, size = 0x8, scoped, tag = 'scoped memory for tpu_custom_call.1']
    #allocation5 [shape = 'u8[65536]{0}', space=vmem, size = 0x10000, scoped, tag = 'input window, operand 1, single buffered']
    #allocation6 [shape = 's32[1]{0}', space=sflag, size = 0x4, scoped, tag = 'scoped memory for tpu_custom_call.1']
    #allocation7 [shape = 'u8[262144]{0}', space=vmem, size = 0x40000, scoped, tag = 'output window, operand 0']
    %9 = vsyncpa [#allocation3], 0
    %s10 = scalar_lea.sflag [#allocation3], 1
    %11 = vsyncpa %s10, 0
    %12 = vsyncpa [#allocation6], 0
    %13 = vsyncpa [#allocation4], 0
    %s14 = scalar_lea.sflag [#allocation4], 1
    %15 = vsyncpa %s14, 0
    loop: start=0, step=1, limit=4
    $region2: #{tpu_custom_call.1} parent=1 // loop_pre_header
      _
    $region3: #{tpu_custom_call.1} parent=1 // loop_header
      %s17 = sphi 0, %s21
      %p18 = scmp.ge.s32.totalorder %s17, 4
      %s27 = sphi 0, %s29
      %s30 = sphi 0, %s27
      %s31 = sphi 0, %s30
      %s47 = sphi 0, %s31
      %s51 = sphi 0, %s51
      %s53 = sphi 0, %s51
      %s54 = sphi 0, %s53
      %s68 = sphi 0, %s54
      %s72 = sphi 0, %s72
      %s74 = sphi 0, %s72
      %s75 = sphi 0, %s74
      %s89 = sphi 0, %s75
      %s93 = sphi 0, %s93
      %s95 = sphi 0, %s93
      %s96 = sphi 0, %s95
      %s110 = sphi 0, %s96
      %s116 = sphi 0, %s118
      %s119 = sphi 0, %s116
      %s120 = sphi 0, %s119
      %s136 = sphi 0, %s120
    $region4: #{tpu_custom_call.1} parent=1 // loop_header_branch
      %20 = sbr.rel (%p18) target = $region8
    $region5: #{tpu_custom_call.1} parent=1 // loop_body
      %s22 = ssub.s32 %s17, 1
      %s23 = ssub.s32 %s17, 2
      %s24 = sadd.s32 %s17, 1
      %s25 = ssub.s32 %s17, %s24
      %p26 = scmp.eq.s32.totalorder %s25, 0
      %s28 = sadd.s32 %s27, 1
      %s29 = scalar_select %p26, %s27, %s28
      %p32 = pneg %p26
      %p33 = scmp.eq.s32.totalorder %s17, 1
      %p34 = por %p32, %p33
      %p35 = scmp.ne.s32.totalorder %s27, %s30
      %p36 = scmp.eq.s32.totalorder %s17, 0
      %p37 = por %p35, %p36
      %p38 = scmp.ne.s32.totalorder %s27, %s30
      %p39 = scmp.eq.s32.totalorder %s22, 1
      %p40 = por %p38, %p39
      %p41 = scmp.ne.s32.totalorder %s30, %s31
      %p42 = scmp.eq.s32.totalorder %s22, 0
      %p43 = por %p41, %p42
      %p44 = scmp.ne.s32.totalorder %s30, %s31
      %p45 = scmp.eq.s32.totalorder %s23, 1
      %p46 = por %p44, %p45
      %p48 = scmp.ne.s32.totalorder %s31, %s47
      %p49 = scmp.eq.s32.totalorder %s23, 0
      %p50 = por %p48, %p49
      %s52 = sadd.s32 %s51, 1
      %p55 = scmp.eq.s32.totalorder %s17, 1
      %p56 = scmp.ne.s32.totalorder %s51, %s53
      %p57 = scmp.eq.s32.totalorder %s17, 0
      %p58 = por %p56, %p57
      %p59 = scmp.ne.s32.totalorder %s51, %s53
      %p60 = scmp.eq.s32.totalorder %s22, 1
      %p61 = por %p59, %p60
      %p62 = scmp.ne.s32.totalorder %s53, %s54
      %p63 = scmp.eq.s32.totalorder %s22, 0
      %p64 = por %p62, %p63
      %p65 = scmp.ne.s32.totalorder %s53, %s54
      %p66 = scmp.eq.s32.totalorder %s23, 1
      %p67 = por %p65, %p66
      %p69 = scmp.ne.s32.totalorder %s54, %s68
      %p70 = scmp.eq.s32.totalorder %s23, 0
      %p71 = por %p69, %p70
      %s73 = sadd.s32 %s72, 1
      %p76 = scmp.eq.s32.totalorder %s17, 1
      %p77 = scmp.ne.s32.totalorder %s72, %s74
      %p78 = scmp.eq.s32.totalorder %s17, 0
      %p79 = por %p77, %p78
      %p80 = scmp.ne.s32.totalorder %s72, %s74
      %p81 = scmp.eq.s32.totalorder %s22, 1
      %p82 = por %p80, %p81
      %p83 = scmp.ne.s32.totalorder %s74, %s75
      %p84 = scmp.eq.s32.totalorder %s22, 0
      %p85 = por %p83, %p84
      %p86 = scmp.ne.s32.totalorder %s74, %s75
      %p87 = scmp.eq.s32.totalorder %s23, 1
      %p88 = por %p86, %p87
      %p90 = scmp.ne.s32.totalorder %s75, %s89
      %p91 = scmp.eq.s32.totalorder %s23, 0
      %p92 = por %p90, %p91
      %s94 = sadd.s32 %s93, 1
      %p97 = scmp.eq.s32.totalorder %s17, 1
      %p98 = scmp.ne.s32.totalorder %s93, %s95
      %p99 = scmp.eq.s32.totalorder %s17, 0
      %p100 = por %p98, %p99
      %p101 = scmp.ne.s32.totalorder %s93, %s95
      %p102 = scmp.eq.s32.totalorder %s22, 1
      %p103 = por %p101, %p102
      %p104 = scmp.ne.s32.totalorder %s95, %s96
      %p105 = scmp.eq.s32.totalorder %s22, 0
      %p106 = por %p104, %p105
      %p107 = scmp.ne.s32.totalorder %s95, %s96
      %p108 = scmp.eq.s32.totalorder %s23, 1
      %p109 = por %p107, %p108
      %p111 = scmp.ne.s32.totalorder %s96, %s110
      %p112 = scmp.eq.s32.totalorder %s23, 0
      %p113 = por %p111, %p112
      %s114 = ssub.s32 %s17, %s24
      %p115 = scmp.eq.s32.totalorder %s114, 0
      %s117 = sadd.s32 %s116, 1
      %s118 = scalar_select %p115, %s116, %s117
      %p121 = pneg %p115
      %p122 = scmp.eq.s32.totalorder %s17, 1
      %p123 = por %p121, %p122
      %p124 = scmp.ne.s32.totalorder %s116, %s119
      %p125 = scmp.eq.s32.totalorder %s17, 0
      %p126 = por %p124, %p125
      %p127 = scmp.ne.s32.totalorder %s116, %s119
      %p128 = scmp.eq.s32.totalorder %s22, 1
      %p129 = por %p127, %p128
      %p130 = scmp.ne.s32.totalorder %s119, %s120
      %p131 = scmp.eq.s32.totalorder %s22, 0
      %p132 = por %p130, %p131
      %p133 = scmp.ne.s32.totalorder %s119, %s120
      %p134 = scmp.eq.s32.totalorder %s23, 1
      %p135 = por %p133, %p134
      %p137 = scmp.ne.s32.totalorder %s120, %s136
      %p138 = scmp.eq.s32.totalorder %s23, 0
      %p139 = por %p137, %p138
      %p140 = scmp.le.s32.totalorder 1, %s17
      %p141 = scmp.lt.s32.totalorder %s17, 3
      %p142 = pnand %p140, %p141
      %p143 = pneg %p142
      // Predicated region
      $region9: #{tpu_custom_call.1} parent=5 // pred_check
        _
      $region10: #{tpu_custom_call.1} parent=5 // pred_check_branch
        %145 = sbr.rel (%p142) target = $region12
      $region11: #{tpu_custom_call.1} parent=5 // pred_region
        %s146 = ssub.s32 %s17, 1
        // Predicated region
        $region13: #{tpu_custom_call.1} parent=11 // pred_check
          %p147 = pneg %p64
        $region14: #{tpu_custom_call.1} parent=11 // pred_check_branch
          %149 = sbr.rel (%p147) target = $region16
        $region15: #{tpu_custom_call.1} parent=11 // pred_region
          %s151 = ssub.s32 2048, 2048
          %152 = vsyncadd [#allocation6], %s151
          %s153 = sshll.u32 [#allocation5], 4
          %s154 = int_to_ptr.vmem [resolvable:$true] %s153
          %159 = dma.hbm_to_vmem [thread:$0]  %s1, 2048, %s154, [#allocation6], 128, 128, 8
        $region16: #{tpu_custom_call.1} parent=11 // pred_fallthru
          _
        // Predicated region
        $region17: #{tpu_custom_call.1} parent=11 // pred_check
          %p160 = pneg %p85
        $region18: #{tpu_custom_call.1} parent=11 // pred_check_branch
          %162 = sbr.rel (%p160) target = $region20
        $region19: #{tpu_custom_call.1} parent=11 // pred_region
          _
        $region20: #{tpu_custom_call.1} parent=11 // pred_fallthru
          _
        // Predicated region
        $region21: #{tpu_custom_call.1} parent=11 // pred_check
          %p163 = pneg %p106
        $region22: #{tpu_custom_call.1} parent=11 // pred_check_branch
          %165 = sbr.rel (%p163) target = $region24
        $region23: #{tpu_custom_call.1} parent=11 // pred_region
          _
        $region24: #{tpu_custom_call.1} parent=11 // pred_fallthru
          _
      $region12: #{tpu_custom_call.1} parent=5 // pred_fallthru
        _
      %p166 = scmp.lt.s32.totalorder %s17, 2
      // Predicated region
      $region25: #{tpu_custom_call.1} parent=5 // pred_check
        %p167 = pneg %p166
      $region26: #{tpu_custom_call.1} parent=5 // pred_check_branch
        %169 = sbr.rel (%p167) target = $region28
      $region27: #{tpu_custom_call.1} parent=5 // pred_region
        // Predicated region
        $region29: #{tpu_custom_call.1} parent=27 // pred_check
          %p170 = pneg %p37
        $region30: #{tpu_custom_call.1} parent=27 // pred_check_branch
          %172 = sbr.rel (%p170) target = $region32
        $region31: #{tpu_custom_call.1} parent=27 // pred_region
          %s173 = sand.u32 %s27, 1
          %s174 = scalar_lea.sflag [#allocation3], %s173
          %s175 = sand.u32 %s27, 1
          %s176 = smul.addr %s175, 256
          %s177 = scalar_lea.vmem [#allocation2], %s176
          %s178 = smul.u32 32, %s17
          %s180 = ssub.s32 4096, 4096
          %181 = vsyncadd %s174, %s180
          %s182 = smul.addr %s178, 128
          %s183 = scalar_lea.hbm %s0, %s182
          %s184 = sshll.u32 %s177, 4
          %s185 = int_to_ptr.vmem [resolvable:$true] %s184
          %190 = dma.hbm_to_vmem [thread:$0]  %s183, 4096, %s185, %s174, 128, 128, 8
        $region32: #{tpu_custom_call.1} parent=27 // pred_fallthru
          _
      $region28: #{tpu_custom_call.1} parent=5 // pred_fallthru
        _
      %p191 = scmp.le.s32.totalorder 1, %s17
      %p192 = scmp.lt.s32.totalorder %s17, 3
      %p193 = pnand %p191, %p192
      %p194 = pneg %p193
      // Predicated region
      $region33: #{tpu_custom_call.1} parent=5 // pred_check
        _
      $region34: #{tpu_custom_call.1} parent=5 // pred_check_branch
        %196 = sbr.rel (%p193) target = $region36
      $region35: #{tpu_custom_call.1} parent=5 // pred_region
        %s197 = ssub.s32 %s17, 1
        %s198 = sand.u32 %s30, 1
        %s199 = scalar_lea.sflag [#allocation3], %s198
        %s200 = sand.u32 %s30, 1
        %s201 = smul.addr %s200, 256
        %s202 = scalar_lea.vmem [#allocation2], %s201
        // Predicated region
        $region37: #{tpu_custom_call.1} parent=35 // pred_check
          %p203 = pneg %p43
        $region38: #{tpu_custom_call.1} parent=35 // pred_check_branch
          %205 = sbr.rel (%p203) target = $region40
        $region39: #{tpu_custom_call.1} parent=35 // pred_region
          %206 = dma.done %s199, 4096
        $region40: #{tpu_custom_call.1} parent=35 // pred_fallthru
          _
        // Predicated region
        $region41: #{tpu_custom_call.1} parent=35 // pred_check
          %p207 = pneg %p64
        $region42: #{tpu_custom_call.1} parent=35 // pred_check_branch
          %209 = sbr.rel (%p207) target = $region44
        $region43: #{tpu_custom_call.1} parent=35 // pred_region
          %210 = dma.done [#allocation6], 2048
        $region44: #{tpu_custom_call.1} parent=35 // pred_fallthru
          _
        %s211 = sand.u32 %s30, 1
        %s212 = scalar_lea.sflag [#allocation3], %s211
        %s213 = sand.u32 %s30, 1
        %s214 = smul.addr %s213, 256
        %s215 = scalar_lea.vmem [#allocation2], %s214
        %p216 = pneg %p43
        %p217 = pneg %p40
        %p218 = pneg %p64
        %p219 = pneg %p61
        %p220 = pneg %p85
        %p221 = pneg %p82
        %p222 = pneg %p106
        %p223 = pneg %p103
        %p224 = pneg %p132
        %p225 = pneg %p129
        %s226 = sand.u32 %s119, 1
        %s227 = scalar_lea.sflag [#allocation4], %s226
        %s228 = sand.u32 %s119, 1
        %s229 = smul.addr %s228, 256
        %s230 = scalar_lea.vmem [#allocation7], %s229
        %s231 = smul.u32 32, %s22
        %s232 = smul.u32 32, %s22
        %v233 = vld [vmem:[%s202] sm:$0xff]
        %v234 = vld [vmem:[%s202 + $0x8] sm:$0xff]
        %v235 = vld [vmem:[%s202 + $0x10] sm:$0xff]
        %v236 = vld [vmem:[%s202 + $0x18] sm:$0xff]
        %v237 = vld [vmem:[%s202 + $0x20] sm:$0xff]
        %v238 = vld [vmem:[%s202 + $0x28] sm:$0xff]
        %v239 = vld [vmem:[%s202 + $0x30] sm:$0xff]
        %v240 = vld [vmem:[%s202 + $0x38] sm:$0xff]
        %v241 = vld [vmem:[%s202 + $0x40] sm:$0xff]
        %v242 = vld [vmem:[%s202 + $0x48] sm:$0xff]
        %v243 = vld [vmem:[%s202 + $0x50] sm:$0xff]
        %v244 = vld [vmem:[%s202 + $0x58] sm:$0xff]
        %v245 = vld [vmem:[%s202 + $0x60] sm:$0xff]
        %v246 = vld [vmem:[%s202 + $0x68] sm:$0xff]
        %v247 = vld [vmem:[%s202 + $0x70] sm:$0xff]
        %v248 = vld [vmem:[%s202 + $0x78] sm:$0xff]
        %v249 = vld [vmem:[%s202 + $0x80] sm:$0xff]
        %v250 = vld [vmem:[%s202 + $0x88] sm:$0xff]
        %v251 = vld [vmem:[%s202 + $0x90] sm:$0xff]
        %v252 = vld [vmem:[%s202 + $0x98] sm:$0xff]
        %v253 = vld [vmem:[%s202 + $0xa0] sm:$0xff]
        %v254 = vld [vmem:[%s202 + $0xa8] sm:$0xff]
        %v255 = vld [vmem:[%s202 + $0xb0] sm:$0xff]
        %v256 = vld [vmem:[%s202 + $0xb8] sm:$0xff]
        %v257 = vld [vmem:[%s202 + $0xc0] sm:$0xff]
        %v258 = vld [vmem:[%s202 + $0xc8] sm:$0xff]
        %v259 = vld [vmem:[%s202 + $0xd0] sm:$0xff]
        %v260 = vld [vmem:[%s202 + $0xd8] sm:$0xff]
        %v261 = vld [vmem:[%s202 + $0xe0] sm:$0xff]
        %v262 = vld [vmem:[%s202 + $0xe8] sm:$0xff]
        %v263 = vld [vmem:[%s202 + $0xf0] sm:$0xff]
        %v264 = vld [vmem:[%s202 + $0xf8] sm:$0xff]
        %v265 = vld [vmem:[#allocation5] sm:$0xff]
        %v266 = vld [vmem:[#allocation5 + $0x8] sm:$0xff]
        %v267 = vld [vmem:[#allocation5 + $0x10] sm:$0xff]
        %v268 = vld [vmem:[#allocation5 + $0x18] sm:$0xff]
        %v269 = vld [vmem:[#allocation5 + $0x20] sm:$0xff]
        %v270 = vld [vmem:[#allocation5 + $0x28] sm:$0xff]
        %v271 = vld [vmem:[#allocation5 + $0x30] sm:$0xff]
        %v272 = vld [vmem:[#allocation5 + $0x38] sm:$0xff]
        %v273 = vld [vmem:[#allocation5 + $0x40] sm:$0xff]
        %v274 = vld [vmem:[#allocation5 + $0x48] sm:$0xff]
        %v275 = vld [vmem:[#allocation5 + $0x50] sm:$0xff]
        %v276 = vld [vmem:[#allocation5 + $0x58] sm:$0xff]
        %v277 = vld [vmem:[#allocation5 + $0x60] sm:$0xff]
        %v278 = vld [vmem:[#allocation5 + $0x68] sm:$0xff]
        %v279 = vld [vmem:[#allocation5 + $0x70] sm:$0xff]
        %v280 = vld [vmem:[#allocation5 + $0x78] sm:$0xff]
        %281 = vmatprep.subr.mxu0 0.0
        %282 = vmatpush1.msra.mxu0 %v280
        %283 = vmatprep.subr.mxu0 0.0
        %284 = vmatpush1.msra.mxu0 %v279
        %285 = vmatprep.subr.mxu0 0.0
        %286 = vmatpush1.msra.mxu0 %v278
        %287 = vmatprep.subr.mxu0 0.0
        %288 = vmatpush1.msra.mxu0 %v277
        %289 = vmatprep.subr.mxu0 0.0
        %290 = vmatpush1.msra.mxu0 %v276
        %291 = vmatprep.subr.mxu0 0.0
        %292 = vmatpush1.msra.mxu0 %v275
        %293 = vmatprep.subr.mxu0 0.0
        %294 = vmatpush1.msra.mxu0 %v274
        %295 = vmatprep.subr.mxu0 0.0
        %296 = vmatpush1.msra.mxu0 %v273
        %297 = vmatprep.subr.mxu0 0.0
        %298 = vmatpush1.msra.mxu0 %v272
        %299 = vmatprep.subr.mxu0 0.0
        %300 = vmatpush1.msra.mxu0 %v271
        %301 = vmatprep.subr.mxu0 0.0
        %302 = vmatpush1.msra.mxu0 %v270
        %303 = vmatprep.subr.mxu0 0.0
        %304 = vmatpush1.msra.mxu0 %v269
        %305 = vmatprep.subr.mxu0 0.0
        %306 = vmatpush1.msra.mxu0 %v268
        %307 = vmatprep.subr.mxu0 0.0
        %308 = vmatpush1.msra.mxu0 %v267
        %309 = vmatprep.subr.mxu0 0.0
        %310 = vmatpush1.msra.mxu0 %v266
        %311 = vmatprep.subr.mxu0 0.0
        %312 = vmatpush1.msra.mxu0 %v265
        %313 = vmatprep.subr.mxu0 0.0
        %314 = vmatpush2.msra.mxu0 0.0
        %315 = vmatprep.subr.mxu0 0.0
        %316 = vmatpush2.msra.mxu0 0.0
        %317 = vmatprep.subr.mxu0 0.0
        %318 = vmatpush2.msra.mxu0 0.0
        %319 = vmatprep.subr.mxu0 0.0
        %320 = vmatpush2.msra.mxu0 0.0
        %321 = vmatprep.subr.mxu0 0.0
        %322 = vmatpush2.msra.mxu0 0.0
        %323 = vmatprep.subr.mxu0 0.0
        %324 = vmatpush2.msra.mxu0 0.0
        %325 = vmatprep.subr.mxu0 0.0
        %326 = vmatpush2.msra.mxu0 0.0
        %327 = vmatprep.subr.mxu0 0.0
        %328 = vmatpush2.msra.mxu0 0.0
        %329 = vmatprep.subr.mxu0 0.0
        %330 = vmatpush2.msra.mxu0 0.0
        %331 = vmatprep.subr.mxu0 0.0
        %332 = vmatpush2.msra.mxu0 0.0
        %333 = vmatprep.subr.mxu0 0.0
        %334 = vmatpush2.msra.mxu0 0.0
        %335 = vmatprep.subr.mxu0 0.0
        %336 = vmatpush2.msra.mxu0 0.0
        %337 = vmatprep.subr.mxu0 0.0
        %338 = vmatpush2.msra.mxu0 0.0
        %339 = vmatprep.subr.mxu0 0.0
        %340 = vmatpush2.msra.mxu0 0.0
        %341 = vmatprep.subr.mxu0 0.0
        %342 = vmatpush2.msra.mxu0 0.0
        %343 = vmatprep.subr.mxu0 0.0
        %344 = vmatpush2.msra.mxu0 0.0
        %345 = vmatprep.mubr.f32.mxu0 0.0
        %346 = vmatmul.mubr.f32.gmra.mxu0 %v233
        %v347 = vpop.f32.mrf.mxu0
        %v348 = vadd.f32 0.0, %v347
        %v349 = vpop.f32.mrf.mxu0
        %350 = vmatprep.mubr.f32.mxu0 0.0
        %351 = vmatmul.mubr.f32.gmra.mxu0 %v234
        %v352 = vpop.f32.mrf.mxu0
        %v353 = vadd.f32 0.0, %v352
        %v354 = vpop.f32.mrf.mxu0
        %355 = vmatprep.mubr.f32.mxu0 0.0
        %356 = vmatmul.mubr.f32.gmra.mxu0 %v235
        %v357 = vpop.f32.mrf.mxu0
        %v358 = vadd.f32 0.0, %v357
        %v359 = vpop.f32.mrf.mxu0
        %360 = vmatprep.mubr.f32.mxu0 0.0
        %361 = vmatmul.mubr.f32.gmra.mxu0 %v236
        %v362 = vpop.f32.mrf.mxu0
        %v363 = vadd.f32 0.0, %v362
        %v364 = vpop.f32.mrf.mxu0
        %365 = vmatprep.mubr.f32.mxu0 0.0
        %366 = vmatmul.mubr.f32.gmra.mxu0 %v237
        %v367 = vpop.f32.mrf.mxu0
        %v368 = vadd.f32 0.0, %v367
        %v369 = vpop.f32.mrf.mxu0
        %370 = vmatprep.mubr.f32.mxu0 0.0
        %371 = vmatmul.mubr.f32.gmra.mxu0 %v238
        %v372 = vpop.f32.mrf.mxu0
        %v373 = vadd.f32 0.0, %v372
        %v374 = vpop.f32.mrf.mxu0
        %375 = vmatprep.mubr.f32.mxu0 0.0
        %376 = vmatmul.mubr.f32.gmra.mxu0 %v239
        %v377 = vpop.f32.mrf.mxu0
        %v378 = vadd.f32 0.0, %v377
        %v379 = vpop.f32.mrf.mxu0
        %380 = vmatprep.mubr.f32.mxu0 0.0
        %381 = vmatmul.mubr.f32.gmra.mxu0 %v240
        %v382 = vpop.f32.mrf.mxu0
        %v383 = vadd.f32 0.0, %v382
        %v384 = vpop.f32.mrf.mxu0
        %385 = vmatprep.mubr.f32.mxu0 0.0
        %386 = vmatmul.mubr.f32.gmra.mxu0 %v241
        %v387 = vpop.f32.mrf.mxu0
        %v388 = vadd.f32 0.0, %v387
        %v389 = vpop.f32.mrf.mxu0
        %390 = vmatprep.mubr.f32.mxu0 0.0
        %391 = vmatmul.mubr.f32.gmra.mxu0 %v242
        %v392 = vpop.f32.mrf.mxu0
        %v393 = vadd.f32 0.0, %v392
        %v394 = vpop.f32.mrf.mxu0
        %395 = vmatprep.mubr.f32.mxu0 0.0
        %396 = vmatmul.mubr.f32.gmra.mxu0 %v243
        %v397 = vpop.f32.mrf.mxu0
        %v398 = vadd.f32 0.0, %v397
        %v399 = vpop.f32.mrf.mxu0
        %400 = vmatprep.mubr.f32.mxu0 0.0
        %401 = vmatmul.mubr.f32.gmra.mxu0 %v244
        %v402 = vpop.f32.mrf.mxu0
        %v403 = vadd.f32 0.0, %v402
        %v404 = vpop.f32.mrf.mxu0
        %405 = vmatprep.mubr.f32.mxu0 0.0
        %406 = vmatmul.mubr.f32.gmra.mxu0 %v245
        %v407 = vpop.f32.mrf.mxu0
        %v408 = vadd.f32 0.0, %v407
        %v409 = vpop.f32.mrf.mxu0
        %410 = vmatprep.mubr.f32.mxu0 0.0
        %411 = vmatmul.mubr.f32.gmra.mxu0 %v246
        %v412 = vpop.f32.mrf.mxu0
        %v413 = vadd.f32 0.0, %v412
        %v414 = vpop.f32.mrf.mxu0
        %415 = vmatprep.mubr.f32.mxu0 0.0
        %416 = vmatmul.mubr.f32.gmra.mxu0 %v247
        %v417 = vpop.f32.mrf.mxu0
        %v418 = vadd.f32 0.0, %v417
        %v419 = vpop.f32.mrf.mxu0
        %420 = vmatprep.mubr.f32.mxu0 0.0
        %421 = vmatmul.mubr.f32.gmra.mxu0 %v248
        %v422 = vpop.f32.mrf.mxu0
        %v423 = vadd.f32 0.0, %v422
        %v424 = vpop.f32.mrf.mxu0
        %425 = vmatprep.mubr.f32.mxu0 0.0
        %426 = vmatmul.mubr.f32.gmra.mxu0 %v249
        %v427 = vpop.f32.mrf.mxu0
        %v428 = vadd.f32 0.0, %v427
        %v429 = vpop.f32.mrf.mxu0
        %430 = vmatprep.mubr.f32.mxu0 0.0
        %431 = vmatmul.mubr.f32.gmra.mxu0 %v250
        %v432 = vpop.f32.mrf.mxu0
        %v433 = vadd.f32 0.0, %v432
        %v434 = vpop.f32.mrf.mxu0
        %435 = vmatprep.mubr.f32.mxu0 0.0
        %436 = vmatmul.mubr.f32.gmra.mxu0 %v251
        %v437 = vpop.f32.mrf.mxu0
        %v438 = vadd.f32 0.0, %v437
        %v439 = vpop.f32.mrf.mxu0
        %440 = vmatprep.mubr.f32.mxu0 0.0
        %441 = vmatmul.mubr.f32.gmra.mxu0 %v252
        %v442 = vpop.f32.mrf.mxu0
        %v443 = vadd.f32 0.0, %v442
        %v444 = vpop.f32.mrf.mxu0
        %445 = vmatprep.mubr.f32.mxu0 0.0
        %446 = vmatmul.mubr.f32.gmra.mxu0 %v253
        %v447 = vpop.f32.mrf.mxu0
        %v448 = vadd.f32 0.0, %v447
        %v449 = vpop.f32.mrf.mxu0
        %450 = vmatprep.mubr.f32.mxu0 0.0
        %451 = vmatmul.mubr.f32.gmra.mxu0 %v254
        %v452 = vpop.f32.mrf.mxu0
        %v453 = vadd.f32 0.0, %v452
        %v454 = vpop.f32.mrf.mxu0
        %455 = vmatprep.mubr.f32.mxu0 0.0
        %456 = vmatmul.mubr.f32.gmra.mxu0 %v255
        %v457 = vpop.f32.mrf.mxu0
        %v458 = vadd.f32 0.0, %v457
        %v459 = vpop.f32.mrf.mxu0
        %460 = vmatprep.mubr.f32.mxu0 0.0
        %461 = vmatmul.mubr.f32.gmra.mxu0 %v256
        %v462 = vpop.f32.mrf.mxu0
        %v463 = vadd.f32 0.0, %v462
        %v464 = vpop.f32.mrf.mxu0
        %465 = vmatprep.mubr.f32.mxu0 0.0
        %466 = vmatmul.mubr.f32.gmra.mxu0 %v257
        %v467 = vpop.f32.mrf.mxu0
        %v468 = vadd.f32 0.0, %v467
        %v469 = vpop.f32.mrf.mxu0
        %470 = vmatprep.mubr.f32.mxu0 0.0
        %471 = vmatmul.mubr.f32.gmra.mxu0 %v258
        %v472 = vpop.f32.mrf.mxu0
        %v473 = vadd.f32 0.0, %v472
        %v474 = vpop.f32.mrf.mxu0
        %475 = vmatprep.mubr.f32.mxu0 0.0
        %476 = vmatmul.mubr.f32.gmra.mxu0 %v259
        %v477 = vpop.f32.mrf.mxu0
        %v478 = vadd.f32 0.0, %v477
        %v479 = vpop.f32.mrf.mxu0
        %480 = vmatprep.mubr.f32.mxu0 0.0
        %481 = vmatmul.mubr.f32.gmra.mxu0 %v260
        %v482 = vpop.f32.mrf.mxu0
        %v483 = vadd.f32 0.0, %v482
        %v484 = vpop.f32.mrf.mxu0
        %485 = vmatprep.mubr.f32.mxu0 0.0
        %486 = vmatmul.mubr.f32.gmra.mxu0 %v261
        %v487 = vpop.f32.mrf.mxu0
        %v488 = vadd.f32 0.0, %v487
        %v489 = vpop.f32.mrf.mxu0
        %490 = vmatprep.mubr.f32.mxu0 0.0
        %491 = vmatmul.mubr.f32.gmra.mxu0 %v262
        %v492 = vpop.f32.mrf.mxu0
        %v493 = vadd.f32 0.0, %v492
        %v494 = vpop.f32.mrf.mxu0
        %495 = vmatprep.mubr.f32.mxu0 0.0
        %496 = vmatmul.mubr.f32.gmra.mxu0 %v263
        %v497 = vpop.f32.mrf.mxu0
        %v498 = vadd.f32 0.0, %v497
        %v499 = vpop.f32.mrf.mxu0
        %500 = vmatprep.mubr.f32.mxu0 0.0
        %501 = vmatmul.mubr.f32.gmra.mxu0 %v264
        %v502 = vpop.f32.mrf.mxu0
        %v503 = vadd.f32 0.0, %v502
        %v504 = vpop.f32.mrf.mxu0
        %505 = vdwg.mxu0
        %v506 = vld [vmem:[%s2] sm:$0x1]
        %v508 = vlaneseq
        %v509 = vshrl.u32 %v508, 7
        %v510 = vsub.s32 0, %v509
        %v511 = vrot.slane %v506, %v510
        %v513 = vmul.f32 %v348, %v511
        %v514 = vmul.f32 %v353, %v511
        %v515 = vmul.f32 %v358, %v511
        %v516 = vmul.f32 %v363, %v511
        %v517 = vmul.f32 %v368, %v511
        %v518 = vmul.f32 %v373, %v511
        %v519 = vmul.f32 %v378, %v511
        %v520 = vmul.f32 %v383, %v511
        %v521 = vmul.f32 %v388, %v511
        %v522 = vmul.f32 %v393, %v511
        %v523 = vmul.f32 %v398, %v511
        %v524 = vmul.f32 %v403, %v511
        %v525 = vmul.f32 %v408, %v511
        %v526 = vmul.f32 %v413, %v511
        %v527 = vmul.f32 %v418, %v511
        %v528 = vmul.f32 %v423, %v511
        %v529 = vmul.f32 %v428, %v511
        %v530 = vmul.f32 %v433, %v511
        %v531 = vmul.f32 %v438, %v511
        %v532 = vmul.f32 %v443, %v511
        %v533 = vmul.f32 %v448, %v511
        %v534 = vmul.f32 %v453, %v511
        %v535 = vmul.f32 %v458, %v511
        %v536 = vmul.f32 %v463, %v511
        %v537 = vmul.f32 %v468, %v511
        %v538 = vmul.f32 %v473, %v511
        %v539 = vmul.f32 %v478, %v511
        %v540 = vmul.f32 %v483, %v511
        %v541 = vmul.f32 %v488, %v511
        %v542 = vmul.f32 %v493, %v511
        %v543 = vmul.f32 %v498, %v511
        %v544 = vmul.f32 %v503, %v511
        %v545 = vld [vmem:[%s3] sm:$0x1]
        %v547 = vlaneseq
        %v548 = vshrl.u32 %v547, 7
        %v549 = vsub.s32 0, %v548
        %v550 = vrot.slane %v545, %v549
        %v552 = vadd.f32 %v513, %v550
        %v553 = vadd.f32 %v514, %v550
        %v554 = vadd.f32 %v515, %v550
        %v555 = vadd.f32 %v516, %v550
        %v556 = vadd.f32 %v517, %v550
        %v557 = vadd.f32 %v518, %v550
        %v558 = vadd.f32 %v519, %v550
        %v559 = vadd.f32 %v520, %v550
        %v560 = vadd.f32 %v521, %v550
        %v561 = vadd.f32 %v522, %v550
        %v562 = vadd.f32 %v523, %v550
        %v563 = vadd.f32 %v524, %v550
        %v564 = vadd.f32 %v525, %v550
        %v565 = vadd.f32 %v526, %v550
        %v566 = vadd.f32 %v527, %v550
        %v567 = vadd.f32 %v528, %v550
        %v568 = vadd.f32 %v529, %v550
        %v569 = vadd.f32 %v530, %v550
        %v570 = vadd.f32 %v531, %v550
        %v571 = vadd.f32 %v532, %v550
        %v572 = vadd.f32 %v533, %v550
        %v573 = vadd.f32 %v534, %v550
        %v574 = vadd.f32 %v535, %v550
        %v575 = vadd.f32 %v536, %v550
        %v576 = vadd.f32 %v537, %v550
        %v577 = vadd.f32 %v538, %v550
        %v578 = vadd.f32 %v539, %v550
        %v579 = vadd.f32 %v540, %v550
        %v580 = vadd.f32 %v541, %v550
        %v581 = vadd.f32 %v542, %v550
        %v582 = vadd.f32 %v543, %v550
        %v583 = vadd.f32 %v544, %v550
        %v584 = vmax.f32 %v552, 0.0
        %v585 = vmax.f32 %v553, 0.0
        %v586 = vmax.f32 %v554, 0.0
        %v587 = vmax.f32 %v555, 0.0
        %v588 = vmax.f32 %v556, 0.0
        %v589 = vmax.f32 %v557, 0.0
        %v590 = vmax.f32 %v558, 0.0
        %v591 = vmax.f32 %v559, 0.0
        %v592 = vmax.f32 %v560, 0.0
        %v593 = vmax.f32 %v561, 0.0
        %v594 = vmax.f32 %v562, 0.0
        %v595 = vmax.f32 %v563, 0.0
        %v596 = vmax.f32 %v564, 0.0
        %v597 = vmax.f32 %v565, 0.0
        %v598 = vmax.f32 %v566, 0.0
        %v599 = vmax.f32 %v567, 0.0
        %v600 = vmax.f32 %v568, 0.0
        %v601 = vmax.f32 %v569, 0.0
        %v602 = vmax.f32 %v570, 0.0
        %v603 = vmax.f32 %v571, 0.0
        %v604 = vmax.f32 %v572, 0.0
        %v605 = vmax.f32 %v573, 0.0
        %v606 = vmax.f32 %v574, 0.0
        %v607 = vmax.f32 %v575, 0.0
        %v608 = vmax.f32 %v576, 0.0
        %v609 = vmax.f32 %v577, 0.0
        %v610 = vmax.f32 %v578, 0.0
        %v611 = vmax.f32 %v579, 0.0
        %v612 = vmax.f32 %v580, 0.0
        %v613 = vmax.f32 %v581, 0.0
        %v614 = vmax.f32 %v582, 0.0
        %v615 = vmax.f32 %v583, 0.0
        %616 = vst [vmem:[%s230] sm:$0xff] %v584
        %617 = vst [vmem:[%s230 + $0x8] sm:$0xff] %v585
        %618 = vst [vmem:[%s230 + $0x10] sm:$0xff] %v586
        %619 = vst [vmem:[%s230 + $0x18] sm:$0xff] %v587
        %620 = vst [vmem:[%s230 + $0x20] sm:$0xff] %v588
        %621 = vst [vmem:[%s230 + $0x28] sm:$0xff] %v589
        %622 = vst [vmem:[%s230 + $0x30] sm:$0xff] %v590
        %623 = vst [vmem:[%s230 + $0x38] sm:$0xff] %v591
        %624 = vst [vmem:[%s230 + $0x40] sm:$0xff] %v592
        %625 = vst [vmem:[%s230 + $0x48] sm:$0xff] %v593
        %626 = vst [vmem:[%s230 + $0x50] sm:$0xff] %v594
        %627 = vst [vmem:[%s230 + $0x58] sm:$0xff] %v595
        %628 = vst [vmem:[%s230 + $0x60] sm:$0xff] %v596
        %629 = vst [vmem:[%s230 + $0x68] sm:$0xff] %v597
        %630 = vst [vmem:[%s230 + $0x70] sm:$0xff] %v598
        %631 = vst [vmem:[%s230 + $0x78] sm:$0xff] %v599
        %632 = vst [vmem:[%s230 + $0x80] sm:$0xff] %v600
        %633 = vst [vmem:[%s230 + $0x88] sm:$0xff] %v601
        %634 = vst [vmem:[%s230 + $0x90] sm:$0xff] %v602
        %635 = vst [vmem:[%s230 + $0x98] sm:$0xff] %v603
        %636 = vst [vmem:[%s230 + $0xa0] sm:$0xff] %v604
        %637 = vst [vmem:[%s230 + $0xa8] sm:$0xff] %v605
        %638 = vst [vmem:[%s230 + $0xb0] sm:$0xff] %v606
        %639 = vst [vmem:[%s230 + $0xb8] sm:$0xff] %v607
        %640 = vst [vmem:[%s230 + $0xc0] sm:$0xff] %v608
        %641 = vst [vmem:[%s230 + $0xc8] sm:$0xff] %v609
        %642 = vst [vmem:[%s230 + $0xd0] sm:$0xff] %v610
        %643 = vst [vmem:[%s230 + $0xd8] sm:$0xff] %v611
        %644 = vst [vmem:[%s230 + $0xe0] sm:$0xff] %v612
        %645 = vst [vmem:[%s230 + $0xe8] sm:$0xff] %v613
        %646 = vst [vmem:[%s230 + $0xf0] sm:$0xff] %v614
        %647 = vst [vmem:[%s230 + $0xf8] sm:$0xff] %v615
        %s648 = sand.u32 %s119, 1
        %s649 = scalar_lea.sflag [#allocation4], %s648
        %s650 = sand.u32 %s119, 1
        %s651 = smul.addr %s650, 256
        %s652 = scalar_lea.vmem [#allocation7], %s651
        // Predicated region
        $region45: #{tpu_custom_call.1} parent=35 // pred_check
          %p653 = pneg %p129
        $region46: #{tpu_custom_call.1} parent=35 // pred_check_branch
          %655 = sbr.rel (%p653) target = $region48
        $region47: #{tpu_custom_call.1} parent=35 // pred_region
          %s656 = smul.u32 32, %s22
          %s658 = ssub.s32 4096, 4096
          %659 = vsyncadd %s649, %s658
          %s660 = smul.addr %s656, 128
          %s661 = scalar_lea.hbm %s4, %s660
          %s662 = sshll.u32 %s652, 4
          %s663 = int_to_ptr.vmem [resolvable:$true] %s662
          %668 = dma.vmem_to_hbm [thread:$0]  %s663, 4096, %s661, %s649, 128, 128, 8
        $region48: #{tpu_custom_call.1} parent=35 // pred_fallthru
          _
      $region36: #{tpu_custom_call.1} parent=5 // pred_fallthru
        _
      %p669 = scmp.le.s32.totalorder 2, %s17
      // Predicated region
      $region49: #{tpu_custom_call.1} parent=5 // pred_check
        %p670 = pneg %p669
      $region50: #{tpu_custom_call.1} parent=5 // pred_check_branch
        %672 = sbr.rel (%p670) target = $region52
      $region51: #{tpu_custom_call.1} parent=5 // pred_region
        %s673 = ssub.s32 %s17, 2
        // Predicated region
        $region53: #{tpu_custom_call.1} parent=51 // pred_check
          %p674 = pneg %p135
        $region54: #{tpu_custom_call.1} parent=51 // pred_check_branch
          %676 = sbr.rel (%p674) target = $region56
        $region55: #{tpu_custom_call.1} parent=51 // pred_region
          %s677 = sand.u32 %s120, 1
          %s678 = scalar_lea.sflag [#allocation4], %s677
          %s679 = sand.u32 %s120, 1
          %s680 = smul.addr %s679, 256
          %s681 = scalar_lea.vmem [#allocation7], %s680
          %682 = dma.done %s678, 4096
        $region56: #{tpu_custom_call.1} parent=51 // pred_fallthru
          _
      $region52: #{tpu_custom_call.1} parent=5 // pred_fallthru
        _
    $region6: #{tpu_custom_call.1} parent=1 // loop_footer
      %s21 = sadd.s32 1, %s17
    $region7: #{tpu_custom_call.1} parent=1 // loop_footer_branch
      %16 = sbr.rel target = $region3
    $region8: #{tpu_custom_call.1} parent=1 // loop_exit
      _
    %683 = vsyncpa [#allocation3], 1
    %s684 = scalar_lea.sflag [#allocation3], 1
    %685 = vsyncpa %s684, 1
    %686 = vsyncpa [#allocation6], 1
    %687 = vsyncpa [#allocation4], 1
    %s688 = scalar_lea.sflag [#allocation4], 1
    %689 = vsyncpa %s688, 1

</llo_original>
